<compile_context>
chip_gen: v6e
topology: v6e:2x2x1
jax: 0.10.0
libtpu: 0.0.40
codegen_flags: <defaults>
</compile_context>

<pallas_src>
import functools
import math

import jax
import jax.numpy as jnp
from jax import lax
from jax.experimental import pallas as pl
from jax.experimental.pallas import tpu as pltpu


# ------------------------- Fused QKV projection (bf16) -------------------------

def _qkv_proj_kernel(x_ref, w_ref, b_ref, o_ref):
    # x_ref: (tm, E) bf16, w_ref: (3E, E) bf16, b_ref: (1, 3E) bf16
    acc = lax.dot_general(
        x_ref[...], w_ref[...],
        (((1,), (1,)), ((), ())),                 # x @ W^T, no transpose materialized
        preferred_element_type=jnp.float32)       # (tm, 3E) f32
    o_ref[...] = (acc + b_ref[...].astype(jnp.float32)).astype(o_ref.dtype)


def fused_qkv_projection(x2d, w_qkv, b_qkv):
    """y = x @ w_qkv.T + b_qkv.  x2d: (M, E) bf16, w_qkv: (3E, E), b_qkv: (3E,)."""
    M, E = x2d.shape
    N = w_qkv.shape[0]                            # 3E
    tm = 256 if M % 256 == 0 else 128             # M is padded to a multiple of 128
    # TODO(synk): tile the (3E, E) weight over N/K for production embed sizes
    # (a resident 3E x E bf16 block would exceed v7x's 64 MiB VMEM at large E);
    # a single resident block is fine at E = 128.
    return pl.pallas_call(
        _qkv_proj_kernel,
        out_shape=jax.ShapeDtypeStruct((M, N), jnp.bfloat16),
        grid=(M // tm,),
        in_specs=[
            pl.BlockSpec((tm, E), lambda i: (i, 0)),
            pl.BlockSpec((N, E), lambda i: (0, 0)),
            pl.BlockSpec((1, N), lambda i: (0, 0)),
        ],
        out_specs=pl.BlockSpec((tm, N), lambda i: (i, 0)),
        compiler_params=pltpu.CompilerParams(dimension_semantics=("parallel",)),
    )(x2d.astype(jnp.bfloat16), w_qkv, b_qkv.reshape(1, N))


# ------------------------ Flash attention (causal, fused) ----------------------

def _flash_kernel(q_ref, k_ref, v_ref, o_ref, m_sc, l_sc, acc_sc, *,
                  scale, num_heads, head_dim, tq, tk):
    qi = pl.program_id(1)
    ki = pl.program_id(2)
    nk = pl.num_programs(2)
    q_start = qi * tq
    k_start = ki * tk

    @pl.when(ki == 0)
    def _init():
        m_sc[...] = jnp.full(m_sc.shape, -jnp.inf, m_sc.dtype)
        l_sc[...] = jnp.zeros(l_sc.shape, l_sc.dtype)
        acc_sc[...] = jnp.zeros(acc_sc.shape, acc_sc.dtype)

    def _update(masked):
        # One online-softmax step for every head; bf16 operands into the MXU,
        # f32 softmax statistics in scratch.
        for h in range(num_heads):
            lo = h * head_dim
            q_h = q_ref[:, lo:lo + head_dim]          # (tq, D) bf16
            k_h = k_ref[:, lo:lo + head_dim]          # (tk, D) bf16
            v_h = v_ref[:, lo:lo + head_dim]          # (tk, D) bf16
            s = lax.dot_general(
                q_h, k_h, (((1,), (1,)), ((), ())),   # contract D, no k transpose
                preferred_element_type=jnp.float32) * scale           # (tq, tk) f32
            if masked:
                row = q_start + lax.broadcasted_iota(jnp.int32, (tq, tk), 0)
                col = k_start + lax.broadcasted_iota(jnp.int32, (tq, tk), 1)
                s = jnp.where(row >= col, s, -jnp.inf)

            m_prev = m_sc[h]                                           # (tq, 1)
            m_new = jnp.maximum(m_prev, s.max(axis=-1, keepdims=True))
            alpha = jnp.exp(m_prev - m_new)
            p = jnp.exp(s - m_new)                                     # (tq, tk) f32
            l_sc[h] = alpha * l_sc[h] + p.sum(axis=-1, keepdims=True)
            acc_sc[h] = alpha * acc_sc[h] + jnp.dot(
                p.astype(v_h.dtype), v_h, preferred_element_type=jnp.float32)
            m_sc[h] = m_new

    # Fully-below-diagonal kv blocks: no mask work at all.
    @pl.when(k_start + (tk - 1) <= q_start)
    def _full_block():
        _update(masked=False)

    # Blocks straddling the causal diagonal: apply the iota mask.
    @pl.when(jnp.logical_and(k_start <= q_start + (tq - 1),
                             k_start + (tk - 1) > q_start))
    def _diag_block():
        _update(masked=True)

    # TODO(synk): kv blocks strictly above the diagonal are still DMA'd and
    # stepped over; a data-dependent inner kv loop (pltpu.emit_pipeline over
    # ki <= qi) would halve K/V HBM traffic for long sequences.

    @pl.when(ki == nk - 1)
    def _finalize():
        for h in range(num_heads):
            lo = h * head_dim
            inv = pl.reciprocal(l_sc[h], approx=True)                  # (tq, 1)
            o_ref[:, lo:lo + head_dim] = (acc_sc[h] * inv).astype(o_ref.dtype)


def flash_attention_fused(qkv3, num_heads, *, scale, tq=128, tk=128):
    """qkv3: (B, S, 3E) bf16 (lane-dense, E = num_heads*head_dim). Causal attention.

    Returns (B, S, E) bf16 with heads packed back into the embedding dim.
    """
    B, S, threeE = qkv3.shape
    E = threeE // 3
    head_dim = E // num_heads
    assert S % tq == 0 and S % tk == 0, "sequence must be padded to tile multiple"
    assert E % 128 == 0, "lane-dense layout needs E to be a multiple of 128"
    nq, nk = S // tq, S // tk

    kernel = functools.partial(
        _flash_kernel, scale=scale, num_heads=num_heads, head_dim=head_dim,
        tq=tq, tk=tk)

    return pl.pallas_call(
        kernel,
        out_shape=jax.ShapeDtypeStruct((B, S, E), qkv3.dtype),
        grid=(B, nq, nk),
        in_specs=[
            pl.BlockSpec((None, tq, E), lambda b, qi, ki: (b, qi, 0)),  # Q lanes
            pl.BlockSpec((None, tk, E), lambda b, qi, ki: (b, ki, 1)),  # K lanes
            pl.BlockSpec((None, tk, E), lambda b, qi, ki: (b, ki, 2)),  # V lanes
        ],
        out_specs=pl.BlockSpec((None, tq, E), lambda b, qi, ki: (b, qi, 0)),
        scratch_shapes=[
            pltpu.VMEM((num_heads, tq, 1), jnp.float32),          # running max
            pltpu.VMEM((num_heads, tq, 1), jnp.float32),          # running denom
            pltpu.VMEM((num_heads, tq, head_dim), jnp.float32),   # running numerator
        ],
        compiler_params=pltpu.CompilerParams(
            dimension_semantics=("parallel", "parallel", "arbitrary")),
    )(qkv3, qkv3, qkv3)


# -------------------------------- Module glue ----------------------------------

def flash_attention_module_forward(hidden_states, params, num_heads, *, tile=128):
    """Equivalent of FlashAttention.forward -> outputs[0]."""
    B, S, E = hidden_states.shape
    head_dim = E // num_heads

    s_pad = ((S + tile - 1) // tile) * tile
    x = hidden_states.astype(jnp.bfloat16)
    if s_pad != S:
        x = jnp.pad(x, ((0, 0), (0, s_pad - S), (0, 0)))
    x2d = x.reshape(B * s_pad, E)

    # Fused QKV weights: (3E, E) / (3E,). x @ W^T is done in-kernel.
    w_qkv = jnp.concatenate(
        [params["wq"], params["wk"], params["wv"]], axis=0).astype(jnp.bfloat16)
    b_qkv = jnp.concatenate(
        [params["bq"], params["bk"], params["bv"]]).astype(jnp.bfloat16)

    qkv = fused_qkv_projection(x2d, w_qkv, b_qkv)          # (B*s_pad, 3E) bf16
    qkv3 = qkv.reshape(B, s_pad, 3 * E)                    # contiguous reshape, free

    tq = tk = min(tile, s_pad)
    o = flash_attention_fused(
        qkv3, num_heads, scale=1.0 / math.sqrt(head_dim), tq=tq, tk=tk)
    return o[:, :S, :]                                     # (B, S, E) bf16


# --------------------------------- Reference ------------------------------------

def reference_forward(hidden_states, params, num_heads):
    B, S, E = hidden_states.shape
    head_dim = E // num_heads
    x = hidden_states.astype(jnp.bfloat16).astype(jnp.float32)

    def proj(w, b):
        y = x.reshape(B * S, E) @ w.astype(jnp.float32).T + b.astype(jnp.float32)
        y = y.astype(jnp.bfloat16).astype(jnp.float32)
        y = y.reshape(B, S, num_heads, head_dim)
        return jnp.transpose(y, (0, 2, 1, 3))

    q = proj(params["wq"], params["bq"])
    k = proj(params["wk"], params["bk"])
    v = proj(params["wv"], params["bv"])
    scale = 1.0 / math.sqrt(head_dim)
    s = jnp.einsum("bhqd,bhkd->bhqk", q, k) * scale
    mask = jnp.tril(jnp.ones((S, S), dtype=bool))
    s = jnp.where(mask[None, None], s, -jnp.inf)
    p = jax.nn.softmax(s, axis=-1)
    o = jnp.einsum("bhqk,bhkd->bhqd", p, v)
    o = jnp.transpose(o, (0, 2, 1, 3)).reshape(B, S, E)
    return o.astype(jnp.bfloat16)


# ----------------------------------- Main ----------------------------------------

if __name__ == "__main__":
    B, S, E, H = 2, 128, 128, 4          # batch, seq, n_embd, num_attention_heads
    key = jax.random.PRNGKey(0)
    kx, kq, kk, kv, kbq, kbk, kbv = jax.random.split(key, 7)

    hidden_states = jax.random.normal(kx, (B, S, E), dtype=jnp.float32)
    init = lambda k, shape: (0.02 * jax.random.normal(k, shape, dtype=jnp.float32)
                             ).astype(jnp.bfloat16)
    params = {
        "wq": init(kq, (E, E)), "bq": init(kbq, (E,)),
        "wk": init(kk, (E, E)), "bk": init(kbk, (E,)),
        "wv": init(kv, (E, E)), "bv": init(kbv, (E,)),
    }

    out = flash_attention_module_forward(hidden_states, params, H)
    out = jax.block_until_ready(out)

    ref = reference_forward(hidden_states, params, H)
    assert out.shape == (B, S, E) and out.dtype == jnp.bfloat16
    assert jnp.allclose(out.astype(jnp.float32), ref.astype(jnp.float32),
                        atol=5e-2, rtol=5e-2), "mismatch vs reference"
    print("KERNEL_OK")
</pallas_src>

<mosaic_0001>
module attributes {stable_mosaic.version = 11 : i64} {
  func.func @_qkv_proj_kernel(%arg0: i32, %arg1: memref<256x128xbf16, #tpu.memory_space<vmem>>, %arg2: memref<384x128xbf16, #tpu.memory_space<vmem>>, %arg3: memref<1x384xbf16, #tpu.memory_space<vmem>>, %arg4: memref<256x384xbf16, #tpu.memory_space<vmem>>) attributes {dimension_semantics = [#tpu.dimension_semantics<parallel>], iteration_bounds = array<i64: 1>, scalar_prefetch = 0 : i64, scratch_operands = 0 : i64, tpu.core_type = #tpu.core_type<tc>, window_params = [{transform_indices = @transform_0, window_bounds = array<i64: 256, 128>}, {pipeline_mode = #tpu.pipeline_mode<synchronous>, transform_indices = @transform_1, window_bounds = array<i64: 384, 128>}, {pipeline_mode = #tpu.pipeline_mode<synchronous>, transform_indices = @transform_2, window_bounds = array<i64: 1, 384>}, {transform_indices = @transform_3, window_bounds = array<i64: 256, 384>}]} {
    %c0 = arith.constant 0 : index
    %c0_0 = arith.constant 0 : index
    %0 = vector.load %arg1[%c0, %c0_0] : memref<256x128xbf16, #tpu.memory_space<vmem>>, vector<256x128xbf16>
    %c0_1 = arith.constant 0 : index
    %c0_2 = arith.constant 0 : index
    %1 = vector.load %arg2[%c0_1, %c0_2] : memref<384x128xbf16, #tpu.memory_space<vmem>>, vector<384x128xbf16>
    %cst = arith.constant dense<0.000000e+00> : vector<256x384xf32>
    %2 = tpu.matmul %0, %1, %cst {dimension_numbers = #tpu.dot_dimension_numbers<[1], [1], [0], [0], [0, 0, 1, 0], [], []>} : vector<256x128xbf16>, vector<384x128xbf16>, vector<256x384xf32> -> vector<256x384xf32>
    %c0_3 = arith.constant 0 : index
    %c0_4 = arith.constant 0 : index
    %3 = vector.load %arg3[%c0_3, %c0_4] : memref<1x384xbf16, #tpu.memory_space<vmem>>, vector<1x384xbf16>
    %4 = arith.extf %3 : vector<1x384xbf16> to vector<1x384xf32>
    %5 = vector.broadcast %4 : vector<1x384xf32> to vector<256x384xf32>
    %6 = arith.addf %2, %5 : vector<256x384xf32>
    %7 = arith.truncf %6 : vector<256x384xf32> to vector<256x384xbf16>
    %c0_5 = arith.constant 0 : index
    %c0_6 = arith.constant 0 : index
    %8 = vector.load %arg4[%c0_5, %c0_6] : memref<256x384xbf16, #tpu.memory_space<vmem>>, vector<256x384xbf16>
    tpu.vector_store %arg4[%c0_5, %c0_6], %7 {strides = array<i32>} : memref<256x384xbf16, #tpu.memory_space<vmem>>, vector<256x384xbf16>,
    return
  }
  func.func @transform_0(%arg0: i32) -> (i32, i32) {
    %c0_i32 = arith.constant 0 : i32
    %c0_i32_0 = arith.constant 0 : i32
    return %arg0, %c0_i32 : i32, i32
  }
  func.func @transform_1(%arg0: i32) -> (i32, i32) {
    %c0_i32 = arith.constant 0 : i32
    %c0_i32_0 = arith.constant 0 : i32
    %c0_i32_1 = arith.constant 0 : i32
    return %c0_i32, %c0_i32_0 : i32, i32
  }
  func.func @transform_2(%arg0: i32) -> (i32, i32) {
    %c0_i32 = arith.constant 0 : i32
    %c0_i32_0 = arith.constant 0 : i32
    %c0_i32_1 = arith.constant 0 : i32
    return %c0_i32, %c0_i32_0 : i32, i32
  }
  func.func @transform_3(%arg0: i32) -> (i32, i32) {
    %c0_i32 = arith.constant 0 : i32
    %c0_i32_0 = arith.constant 0 : i32
    return %arg0, %c0_i32 : i32, i32
  }
}

</mosaic_0001>

<llo_original>
// kernel: tpu_custom_call.1
$region0: #{tpu_custom_call.1}
  #allocation0 [shape = 'u32[]', space=smem, size = 0x4, offset = 0x4, fixed_abs, tag = 'smem constant byte address 0x4 - core index']
  #allocation1 [shape = 'u32[144,128]{1,0:T(1,128)}', space=vmem, size = 0x12000, scoped, tag = 'internal scratch']
  %s0 = inlined_call_operand.hbm [shape: bf16[256,128], index: 0, kind: input, shape index: {}]
  %s1 = inlined_call_operand.hbm [shape: bf16[384,128], index: 1, kind: input, shape index: {}]
  %s2 = inlined_call_operand.vmem [shape: bf16[1,384], index: 2, kind: input, shape index: {}]
  %s3 = inlined_call_operand.hbm [shape: bf16[256,384], index: 3, kind: output, shape index: {}]
  %s4 = sld [smem:[#allocation0]]
  $region30: #{tpu_custom_call.1} parent=0
    _
  %s6 = ssub.s32 1, %s4
  %s7 = scalar_select 0, %s6, %s4
  $region1: #{tpu_custom_call.1} parent=0
    #allocation2 [shape = 'u8[65536]{0}', space=vmem, size = 0x10000, scoped, tag = 'input window, operand 0, single buffered']
    #allocation3 [shape = 's32[1]{0}', space=sflag, size = 0x4, scoped, tag = 'scoped memory for tpu_custom_call.1']
    #allocation4 [shape = 's32[1]{0}', space=sflag, size = 0x4, scoped, tag = 'scoped memory for tpu_custom_call.1']
    #allocation5 [shape = 'u8[98304]{0}', space=vmem, size = 0x18000, scoped, tag = 'input window, operand 1, single buffered']
    #allocation6 [shape = 's32[1]{0}', space=sflag, size = 0x4, scoped, tag = 'scoped memory for tpu_custom_call.1']
    #allocation7 [shape = 'u8[196608]{0}', space=vmem, size = 0x30000, scoped, tag = 'output window, operand 0, single buffered']
    %8 = vsyncpa [#allocation3], 0
    %9 = vsyncpa [#allocation6], 0
    %10 = vsyncpa [#allocation4], 0
    // Predicated region
    $region2: #{tpu_custom_call.1} parent=1 // pred_check
      _
    $region3: #{tpu_custom_call.1} parent=1 // pred_check_branch
      %12 = sbr.rel (0) target = $region5
    $region4: #{tpu_custom_call.1} parent=1 // pred_region
      %s14 = ssub.s32 2048, 2048
      %15 = vsyncadd [#allocation3], %s14
      %s16 = sshll.u32 [#allocation2], 4
      %s17 = int_to_ptr.vmem [resolvable:$true] %s16
      %22 = dma.hbm_to_vmem [thread:$0]  %s0, 2048, %s17, [#allocation3], 64, 64, 4
    $region5: #{tpu_custom_call.1} parent=1 // pred_fallthru
      _
    // Predicated region
    $region6: #{tpu_custom_call.1} parent=1 // pred_check
      _
    $region7: #{tpu_custom_call.1} parent=1 // pred_check_branch
      %24 = sbr.rel (0) target = $region9
    $region8: #{tpu_custom_call.1} parent=1 // pred_region
      %s26 = ssub.s32 3072, 3072
      %27 = vsyncadd [#allocation6], %s26
      %s28 = sshll.u32 [#allocation5], 4
      %s29 = int_to_ptr.vmem [resolvable:$true] %s28
      %34 = dma.hbm_to_vmem [thread:$0]  %s1, 3072, %s29, [#allocation6], 64, 64, 4
    $region9: #{tpu_custom_call.1} parent=1 // pred_fallthru
      _
    // Predicated region
    $region10: #{tpu_custom_call.1} parent=1 // pred_check
      _
    $region11: #{tpu_custom_call.1} parent=1 // pred_check_branch
      %36 = sbr.rel (0) target = $region13
    $region12: #{tpu_custom_call.1} parent=1 // pred_region
      _
    $region13: #{tpu_custom_call.1} parent=1 // pred_fallthru
      _
    // Predicated region
    $region14: #{tpu_custom_call.1} parent=1 // pred_check
      _
    $region15: #{tpu_custom_call.1} parent=1 // pred_check_branch
      %38 = sbr.rel (0) target = $region17
    $region16: #{tpu_custom_call.1} parent=1 // pred_region
      %39 = dma.done [#allocation3], 2048
    $region17: #{tpu_custom_call.1} parent=1 // pred_fallthru
      _
    // Predicated region
    $region18: #{tpu_custom_call.1} parent=1 // pred_check
      _
    $region19: #{tpu_custom_call.1} parent=1 // pred_check_branch
      %41 = sbr.rel (0) target = $region21
    $region20: #{tpu_custom_call.1} parent=1 // pred_region
      %42 = dma.done [#allocation6], 3072
    $region21: #{tpu_custom_call.1} parent=1 // pred_fallthru
      _
    %v44 = vld [vmem:[#allocation2] sm:$0xf]
    %v45 = vld [vmem:[#allocation2 + $0x4] sm:$0xf]
    %v46 = vld [vmem:[#allocation2 + $0x8] sm:$0xf]
    %v47 = vld [vmem:[#allocation2 + $0xc] sm:$0xf]
    %v48 = vld [vmem:[#allocation2 + $0x10] sm:$0xf]
    %v49 = vld [vmem:[#allocation2 + $0x14] sm:$0xf]
    %v50 = vld [vmem:[#allocation2 + $0x18] sm:$0xf]
    %v51 = vld [vmem:[#allocation2 + $0x1c] sm:$0xf]
    %v52 = vld [vmem:[#allocation2 + $0x20] sm:$0xf]
    %v53 = vld [vmem:[#allocation2 + $0x24] sm:$0xf]
    %v54 = vld [vmem:[#allocation2 + $0x28] sm:$0xf]
    %v55 = vld [vmem:[#allocation2 + $0x2c] sm:$0xf]
    %v56 = vld [vmem:[#allocation2 + $0x30] sm:$0xf]
    %v57 = vld [vmem:[#allocation2 + $0x34] sm:$0xf]
    %v58 = vld [vmem:[#allocation2 + $0x38] sm:$0xf]
    %v59 = vld [vmem:[#allocation2 + $0x3c] sm:$0xf]
    %v60 = vld [vmem:[#allocation2 + $0x40] sm:$0xf]
    %v61 = vld [vmem:[#allocation2 + $0x44] sm:$0xf]
    %v62 = vld [vmem:[#allocation2 + $0x48] sm:$0xf]
    %v63 = vld [vmem:[#allocation2 + $0x4c] sm:$0xf]
    %v64 = vld [vmem:[#allocation2 + $0x50] sm:$0xf]
    %v65 = vld [vmem:[#allocation2 + $0x54] sm:$0xf]
    %v66 = vld [vmem:[#allocation2 + $0x58] sm:$0xf]
    %v67 = vld [vmem:[#allocation2 + $0x5c] sm:$0xf]
    %v68 = vld [vmem:[#allocation2 + $0x60] sm:$0xf]
    %v69 = vld [vmem:[#allocation2 + $0x64] sm:$0xf]
    %v70 = vld [vmem:[#allocation2 + $0x68] sm:$0xf]
    %v71 = vld [vmem:[#allocation2 + $0x6c] sm:$0xf]
    %v72 = vld [vmem:[#allocation2 + $0x70] sm:$0xf]
    %v73 = vld [vmem:[#allocation2 + $0x74] sm:$0xf]
    %v74 = vld [vmem:[#allocation2 + $0x78] sm:$0xf]
    %v75 = vld [vmem:[#allocation2 + $0x7c] sm:$0xf]
    %v76 = vld [vmem:[#allocation5] sm:$0xf]
    %v77 = vld [vmem:[#allocation5 + $0x4] sm:$0xf]
    %v78 = vld [vmem:[#allocation5 + $0x8] sm:$0xf]
    %v79 = vld [vmem:[#allocation5 + $0xc] sm:$0xf]
    %v80 = vld [vmem:[#allocation5 + $0x10] sm:$0xf]
    %v81 = vld [vmem:[#allocation5 + $0x14] sm:$0xf]
    %v82 = vld [vmem:[#allocation5 + $0x18] sm:$0xf]
    %v83 = vld [vmem:[#allocation5 + $0x1c] sm:$0xf]
    %v84 = vld [vmem:[#allocation5 + $0x20] sm:$0xf]
    %v85 = vld [vmem:[#allocation5 + $0x24] sm:$0xf]
    %v86 = vld [vmem:[#allocation5 + $0x28] sm:$0xf]
    %v87 = vld [vmem:[#allocation5 + $0x2c] sm:$0xf]
    %v88 = vld [vmem:[#allocation5 + $0x30] sm:$0xf]
    %v89 = vld [vmem:[#allocation5 + $0x34] sm:$0xf]
    %v90 = vld [vmem:[#allocation5 + $0x38] sm:$0xf]
    %v91 = vld [vmem:[#allocation5 + $0x3c] sm:$0xf]
    %v92 = vld [vmem:[#allocation5 + $0x40] sm:$0xf]
    %v93 = vld [vmem:[#allocation5 + $0x44] sm:$0xf]
    %v94 = vld [vmem:[#allocation5 + $0x48] sm:$0xf]
    %v95 = vld [vmem:[#allocation5 + $0x4c] sm:$0xf]
    %v96 = vld [vmem:[#allocation5 + $0x50] sm:$0xf]
    %v97 = vld [vmem:[#allocation5 + $0x54] sm:$0xf]
    %v98 = vld [vmem:[#allocation5 + $0x58] sm:$0xf]
    %v99 = vld [vmem:[#allocation5 + $0x5c] sm:$0xf]
    %v100 = vld [vmem:[#allocation5 + $0x60] sm:$0xf]
    %v101 = vld [vmem:[#allocation5 + $0x64] sm:$0xf]
    %v102 = vld [vmem:[#allocation5 + $0x68] sm:$0xf]
    %v103 = vld [vmem:[#allocation5 + $0x6c] sm:$0xf]
    %v104 = vld [vmem:[#allocation5 + $0x70] sm:$0xf]
    %v105 = vld [vmem:[#allocation5 + $0x74] sm:$0xf]
    %v106 = vld [vmem:[#allocation5 + $0x78] sm:$0xf]
    %v107 = vld [vmem:[#allocation5 + $0x7c] sm:$0xf]
    %v108 = vld [vmem:[#allocation5 + $0x80] sm:$0xf]
    %v109 = vld [vmem:[#allocation5 + $0x84] sm:$0xf]
    %v110 = vld [vmem:[#allocation5 + $0x88] sm:$0xf]
    %v111 = vld [vmem:[#allocation5 + $0x8c] sm:$0xf]
    %v112 = vld [vmem:[#allocation5 + $0x90] sm:$0xf]
    %v113 = vld [vmem:[#allocation5 + $0x94] sm:$0xf]
    %v114 = vld [vmem:[#allocation5 + $0x98] sm:$0xf]
    %v115 = vld [vmem:[#allocation5 + $0x9c] sm:$0xf]
    %v116 = vld [vmem:[#allocation5 + $0xa0] sm:$0xf]
    %v117 = vld [vmem:[#allocation5 + $0xa4] sm:$0xf]
    %v118 = vld [vmem:[#allocation5 + $0xa8] sm:$0xf]
    %v119 = vld [vmem:[#allocation5 + $0xac] sm:$0xf]
    %v120 = vld [vmem:[#allocation5 + $0xb0] sm:$0xf]
    %v121 = vld [vmem:[#allocation5 + $0xb4] sm:$0xf]
    %v122 = vld [vmem:[#allocation5 + $0xb8] sm:$0xf]
    %v123 = vld [vmem:[#allocation5 + $0xbc] sm:$0xf]
    %v124 = vld [vmem:[%s2] sm:$0x7]
    %v125 = vunpack.c.l.bf16 %v124
    %v127 = vlaneseq
    %v128 = vshrl.u32 %v127, 7
    %v129 = vsub.s32 0, %v128
    %v130 = vrot.slane %v125, %v129
    %v131 = vlaneseq
    %v132 = vshrl.u32 %v131, 7
    %v133 = vsub.s32 2, %v132
    %v134 = vrot.slane %v125, %v133
    %v135 = vlaneseq
    %v136 = vshrl.u32 %v135, 7
    %v137 = vsub.s32 4, %v136
    %v138 = vrot.slane %v125, %v137
    %v142 = vlaneseq
    %v143 = vshrl.u32 %v142, 7
    %v144 = vsub.s32 0, %v143
    %v145 = vrot.slane %v130, %v144
    %v146 = vlaneseq
    %v147 = vshrl.u32 %v146, 7
    %v148 = vsub.s32 0, %v147
    %v149 = vrot.slane %v134, %v148
    %v150 = vlaneseq
    %v151 = vshrl.u32 %v150, 7
    %v152 = vsub.s32 0, %v151
    %v153 = vrot.slane %v138, %v152
    %v186 = vunpack.c.l.b16 %v44
    %v187 = vunpack.c.l.b16 %v45
    %v188 = vunpack.c.l.b16 %v46
    %v189 = vunpack.c.l.b16 %v47
    %v190 = vunpack.c.l.b16 %v48
    %v191 = vunpack.c.l.b16 %v49
    %v192 = vunpack.c.l.b16 %v50
    %v193 = vunpack.c.l.b16 %v51
    %v194 = vunpack.c.l.b16 %v52
    %v195 = vunpack.c.l.b16 %v53
    %v196 = vunpack.c.l.b16 %v54
    %v197 = vunpack.c.l.b16 %v55
    %v198 = vunpack.c.l.b16 %v56
    %v199 = vunpack.c.l.b16 %v57
    %v200 = vunpack.c.l.b16 %v58
    %v201 = vunpack.c.l.b16 %v59
    %v202 = vunpack.c.l.b16 %v60
    %v203 = vunpack.c.l.b16 %v61
    %v204 = vunpack.c.l.b16 %v62
    %v205 = vunpack.c.l.b16 %v63
    %v206 = vunpack.c.l.b16 %v64
    %v207 = vunpack.c.l.b16 %v65
    %v208 = vunpack.c.l.b16 %v66
    %v209 = vunpack.c.l.b16 %v67
    %v210 = vunpack.c.l.b16 %v68
    %v211 = vunpack.c.l.b16 %v69
    %v212 = vunpack.c.l.b16 %v70
    %v213 = vunpack.c.l.b16 %v71
    %v214 = vunpack.c.l.b16 %v72
    %v215 = vunpack.c.l.b16 %v73
    %v216 = vunpack.c.l.b16 %v74
    %v217 = vunpack.c.l.b16 %v75
    %v218 = vpack.c.b16 %v187, %v186
    %v219 = vpack.c.b16 %v189, %v188
    %v220 = vpack.c.b16 %v191, %v190
    %v221 = vpack.c.b16 %v193, %v192
    %v222 = vpack.c.b16 %v195, %v194
    %v223 = vpack.c.b16 %v197, %v196
    %v224 = vpack.c.b16 %v199, %v198
    %v225 = vpack.c.b16 %v201, %v200
    %v226 = vpack.c.b16 %v203, %v202
    %v227 = vpack.c.b16 %v205, %v204
    %v228 = vpack.c.b16 %v207, %v206
    %v229 = vpack.c.b16 %v209, %v208
    %v230 = vpack.c.b16 %v211, %v210
    %v231 = vpack.c.b16 %v213, %v212
    %v232 = vpack.c.b16 %v215, %v214
    %v233 = vpack.c.b16 %v217, %v216
    %v298 = vunpack.c.l.b16 %v76
    %v299 = vunpack.c.l.b16 %v77
    %v300 = vunpack.c.l.b16 %v78
    %v301 = vunpack.c.l.b16 %v79
    %v302 = vunpack.c.l.b16 %v80
    %v303 = vunpack.c.l.b16 %v81
    %v304 = vunpack.c.l.b16 %v82
    %v305 = vunpack.c.l.b16 %v83
    %v306 = vunpack.c.l.b16 %v84
    %v307 = vunpack.c.l.b16 %v85
    %v308 = vunpack.c.l.b16 %v86
    %v309 = vunpack.c.l.b16 %v87
    %v310 = vunpack.c.l.b16 %v88
    %v311 = vunpack.c.l.b16 %v89
    %v312 = vunpack.c.l.b16 %v90
    %v313 = vunpack.c.l.b16 %v91
    %v314 = vunpack.c.l.b16 %v92
    %v315 = vunpack.c.l.b16 %v93
    %v316 = vunpack.c.l.b16 %v94
    %v317 = vunpack.c.l.b16 %v95
    %v318 = vunpack.c.l.b16 %v96
    %v319 = vunpack.c.l.b16 %v97
    %v320 = vunpack.c.l.b16 %v98
    %v321 = vunpack.c.l.b16 %v99
    %v322 = vunpack.c.l.b16 %v100
    %v323 = vunpack.c.l.b16 %v101
    %v324 = vunpack.c.l.b16 %v102
    %v325 = vunpack.c.l.b16 %v103
    %v326 = vunpack.c.l.b16 %v104
    %v327 = vunpack.c.l.b16 %v105
    %v328 = vunpack.c.l.b16 %v106
    %v329 = vunpack.c.l.b16 %v107
    %v330 = vunpack.c.l.b16 %v108
    %v331 = vunpack.c.l.b16 %v109
    %v332 = vunpack.c.l.b16 %v110
    %v333 = vunpack.c.l.b16 %v111
    %v334 = vunpack.c.l.b16 %v112
    %v335 = vunpack.c.l.b16 %v113
    %v336 = vunpack.c.l.b16 %v114
    %v337 = vunpack.c.l.b16 %v115
    %v338 = vunpack.c.l.b16 %v116
    %v339 = vunpack.c.l.b16 %v117
    %v340 = vunpack.c.l.b16 %v118
    %v341 = vunpack.c.l.b16 %v119
    %v342 = vunpack.c.l.b16 %v120
    %v343 = vunpack.c.l.b16 %v121
    %v344 = vunpack.c.l.b16 %v122
    %v345 = vunpack.c.l.b16 %v123
    %v346 = vpack.c.b16 %v299, %v298
    %v347 = vpack.c.b16 %v301, %v300
    %v348 = vpack.c.b16 %v303, %v302
    %v349 = vpack.c.b16 %v305, %v304
    %v350 = vpack.c.b16 %v307, %v306
    %v351 = vpack.c.b16 %v309, %v308
    %v352 = vpack.c.b16 %v311, %v310
    %v353 = vpack.c.b16 %v313, %v312
    %v354 = vpack.c.b16 %v315, %v314
    %v355 = vpack.c.b16 %v317, %v316
    %v356 = vpack.c.b16 %v319, %v318
    %v357 = vpack.c.b16 %v321, %v320
    %v358 = vpack.c.b16 %v323, %v322
    %v359 = vpack.c.b16 %v325, %v324
    %v360 = vpack.c.b16 %v327, %v326
    %v361 = vpack.c.b16 %v329, %v328
    %v362 = vpack.c.b16 %v331, %v330
    %v363 = vpack.c.b16 %v333, %v332
    %v364 = vpack.c.b16 %v335, %v334
    %v365 = vpack.c.b16 %v337, %v336
    %v366 = vpack.c.b16 %v339, %v338
    %v367 = vpack.c.b16 %v341, %v340
    %v368 = vpack.c.b16 %v343, %v342
    %v369 = vpack.c.b16 %v345, %v344
    %394 = vmatprep.subr.bf16.mxu0 0
    %395 = vmatpush1.bf16.xpose.msra.mxu0 %v353
    %396 = vmatprep.subr.bf16.mxu0 0
    %397 = vmatpush1.bf16.xpose.msra.mxu0 %v352
    %398 = vmatprep.subr.bf16.mxu0 0
    %399 = vmatpush1.bf16.xpose.msra.mxu0 %v351
    %400 = vmatprep.subr.bf16.mxu0 0
    %401 = vmatpush1.bf16.xpose.msra.mxu0 %v350
    %402 = vmatprep.subr.bf16.mxu0 0
    %403 = vmatpush1.bf16.xpose.msra.mxu0 %v349
    %404 = vmatprep.subr.bf16.mxu0 0
    %405 = vmatpush1.bf16.xpose.msra.mxu0 %v348
    %406 = vmatprep.subr.bf16.mxu0 0
    %407 = vmatpush1.bf16.xpose.msra.mxu0 %v347
    %408 = vmatprep.subr.bf16.mxu0 0
    %409 = vmatpush1.bf16.xpose.msra.mxu0 %v346
    %410 = vmatprep.subr.bf16.mxu0 0
    %411 = vmatpush2.bf16.xpose.msra.mxu0 %v361
    %412 = vmatprep.subr.bf16.mxu0 0
    %413 = vmatpush2.bf16.xpose.msra.mxu0 %v360
    %414 = vmatprep.subr.bf16.mxu0 0
    %415 = vmatpush2.bf16.xpose.msra.mxu0 %v359
    %416 = vmatprep.subr.bf16.mxu0 0
    %417 = vmatpush2.bf16.xpose.msra.mxu0 %v358
    %418 = vmatprep.subr.bf16.mxu0 0
    %419 = vmatpush2.bf16.xpose.msra.mxu0 %v357
    %420 = vmatprep.subr.bf16.mxu0 0
    %421 = vmatpush2.bf16.xpose.msra.mxu0 %v356
    %422 = vmatprep.subr.bf16.mxu0 0
    %423 = vmatpush2.bf16.xpose.msra.mxu0 %v355
    %424 = vmatprep.subr.bf16.mxu0 0
    %425 = vmatpush2.bf16.xpose.msra.mxu0 %v354
    %426 = vmatprep.mubr.bf16.mxu0 0
    %427 = vmatmul.mubr.bf16.gmra.mxu0 %v218
    %v428 = vpop.f32.mrf.mxu0
    %v429 = vadd.f32 %v145, %v428
    %v430 = vpop.f32.mrf.mxu0
    %v431 = vadd.f32 %v149, %v430
    %v432 = vpop.f32.mrf.mxu0
    %v433 = vadd.f32 %v145, %v432
    %v434 = vpop.f32.mrf.mxu0
    %v435 = vadd.f32 %v149, %v434
    %436 = vmatprep.mubr.bf16.mxu0 0
    %437 = vmatmul.mubr.bf16.gmra.mxu0 %v219
    %v438 = vpop.f32.mrf.mxu0
    %v439 = vadd.f32 %v145, %v438
    %v440 = vpop.f32.mrf.mxu0
    %v441 = vadd.f32 %v149, %v440
    %v442 = vpop.f32.mrf.mxu0
    %v443 = vadd.f32 %v145, %v442
    %v444 = vpop.f32.mrf.mxu0
    %v445 = vadd.f32 %v149, %v444
    %446 = vmatprep.mubr.bf16.mxu0 0
    %447 = vmatmul.mubr.bf16.gmra.mxu0 %v220
    %v448 = vpop.f32.mrf.mxu0
    %v449 = vadd.f32 %v145, %v448
    %v450 = vpop.f32.mrf.mxu0
    %v451 = vadd.f32 %v149, %v450
    %v452 = vpop.f32.mrf.mxu0
    %v453 = vadd.f32 %v145, %v452
    %v454 = vpop.f32.mrf.mxu0
    %v455 = vadd.f32 %v149, %v454
    %456 = vmatprep.mubr.bf16.mxu0 0
    %457 = vmatmul.mubr.bf16.gmra.mxu0 %v221
    %v458 = vpop.f32.mrf.mxu0
    %v459 = vadd.f32 %v145, %v458
    %v460 = vpop.f32.mrf.mxu0
    %v461 = vadd.f32 %v149, %v460
    %v462 = vpop.f32.mrf.mxu0
    %v463 = vadd.f32 %v145, %v462
    %v464 = vpop.f32.mrf.mxu0
    %v465 = vadd.f32 %v149, %v464
    %466 = vmatprep.mubr.bf16.mxu0 0
    %467 = vmatmul.mubr.bf16.gmra.mxu0 %v222
    %v468 = vpop.f32.mrf.mxu0
    %v469 = vadd.f32 %v145, %v468
    %v470 = vpop.f32.mrf.mxu0
    %v471 = vadd.f32 %v149, %v470
    %v472 = vpop.f32.mrf.mxu0
    %v473 = vadd.f32 %v145, %v472
    %v474 = vpop.f32.mrf.mxu0
    %v475 = vadd.f32 %v149, %v474
    %476 = vmatprep.mubr.bf16.mxu0 0
    %477 = vmatmul.mubr.bf16.gmra.mxu0 %v223
    %v478 = vpop.f32.mrf.mxu0
    %v479 = vadd.f32 %v145, %v478
    %v480 = vpop.f32.mrf.mxu0
    %v481 = vadd.f32 %v149, %v480
    %v482 = vpop.f32.mrf.mxu0
    %v483 = vadd.f32 %v145, %v482
    %v484 = vpop.f32.mrf.mxu0
    %v485 = vadd.f32 %v149, %v484
    %486 = vmatprep.mubr.bf16.mxu0 0
    %487 = vmatmul.mubr.bf16.gmra.mxu0 %v224
    %v488 = vpop.f32.mrf.mxu0
    %v489 = vadd.f32 %v145, %v488
    %v490 = vpop.f32.mrf.mxu0
    %v491 = vadd.f32 %v149, %v490
    %v492 = vpop.f32.mrf.mxu0
    %v493 = vadd.f32 %v145, %v492
    %v494 = vpop.f32.mrf.mxu0
    %v495 = vadd.f32 %v149, %v494
    %496 = vmatprep.mubr.bf16.mxu0 0
    %497 = vmatmul.mubr.bf16.gmra.mxu0 %v225
    %v498 = vpop.f32.mrf.mxu0
    %v499 = vadd.f32 %v145, %v498
    %v500 = vpop.f32.mrf.mxu0
    %v501 = vadd.f32 %v149, %v500
    %v502 = vpop.f32.mrf.mxu0
    %v503 = vadd.f32 %v145, %v502
    %v504 = vpop.f32.mrf.mxu0
    %v505 = vadd.f32 %v149, %v504
    %506 = vmatprep.mubr.bf16.mxu0 0
    %507 = vmatmul.mubr.bf16.gmra.mxu0 %v226
    %v508 = vpop.f32.mrf.mxu0
    %v509 = vadd.f32 %v145, %v508
    %v510 = vpop.f32.mrf.mxu0
    %v511 = vadd.f32 %v149, %v510
    %v512 = vpop.f32.mrf.mxu0
    %v513 = vadd.f32 %v145, %v512
    %v514 = vpop.f32.mrf.mxu0
    %v515 = vadd.f32 %v149, %v514
    %516 = vmatprep.mubr.bf16.mxu0 0
    %517 = vmatmul.mubr.bf16.gmra.mxu0 %v227
    %v518 = vpop.f32.mrf.mxu0
    %v519 = vadd.f32 %v145, %v518
    %v520 = vpop.f32.mrf.mxu0
    %v521 = vadd.f32 %v149, %v520
    %v522 = vpop.f32.mrf.mxu0
    %v523 = vadd.f32 %v145, %v522
    %v524 = vpop.f32.mrf.mxu0
    %v525 = vadd.f32 %v149, %v524
    %526 = vmatprep.mubr.bf16.mxu0 0
    %527 = vmatmul.mubr.bf16.gmra.mxu0 %v228
    %v528 = vpop.f32.mrf.mxu0
    %v529 = vadd.f32 %v145, %v528
    %v530 = vpop.f32.mrf.mxu0
    %v531 = vadd.f32 %v149, %v530
    %v532 = vpop.f32.mrf.mxu0
    %v533 = vadd.f32 %v145, %v532
    %v534 = vpop.f32.mrf.mxu0
    %v535 = vadd.f32 %v149, %v534
    %536 = vmatprep.mubr.bf16.mxu0 0
    %537 = vmatmul.mubr.bf16.gmra.mxu0 %v229
    %v538 = vpop.f32.mrf.mxu0
    %v539 = vadd.f32 %v145, %v538
    %v540 = vpop.f32.mrf.mxu0
    %v541 = vadd.f32 %v149, %v540
    %v542 = vpop.f32.mrf.mxu0
    %v543 = vadd.f32 %v145, %v542
    %v544 = vpop.f32.mrf.mxu0
    %v545 = vadd.f32 %v149, %v544
    %546 = vmatprep.mubr.bf16.mxu0 0
    %547 = vmatmul.mubr.bf16.gmra.mxu0 %v230
    %v548 = vpop.f32.mrf.mxu0
    %v549 = vadd.f32 %v145, %v548
    %v550 = vpop.f32.mrf.mxu0
    %v551 = vadd.f32 %v149, %v550
    %v552 = vpop.f32.mrf.mxu0
    %v553 = vadd.f32 %v145, %v552
    %v554 = vpop.f32.mrf.mxu0
    %v555 = vadd.f32 %v149, %v554
    %556 = vmatprep.mubr.bf16.mxu0 0
    %557 = vmatmul.mubr.bf16.gmra.mxu0 %v231
    %v558 = vpop.f32.mrf.mxu0
    %v559 = vadd.f32 %v145, %v558
    %v560 = vpop.f32.mrf.mxu0
    %v561 = vadd.f32 %v149, %v560
    %v562 = vpop.f32.mrf.mxu0
    %v563 = vadd.f32 %v145, %v562
    %v564 = vpop.f32.mrf.mxu0
    %v565 = vadd.f32 %v149, %v564
    %566 = vmatprep.mubr.bf16.mxu0 0
    %567 = vmatmul.mubr.bf16.gmra.mxu0 %v232
    %v568 = vpop.f32.mrf.mxu0
    %v569 = vadd.f32 %v145, %v568
    %v570 = vpop.f32.mrf.mxu0
    %v571 = vadd.f32 %v149, %v570
    %v572 = vpop.f32.mrf.mxu0
    %v573 = vadd.f32 %v145, %v572
    %v574 = vpop.f32.mrf.mxu0
    %v575 = vadd.f32 %v149, %v574
    %576 = vmatprep.mubr.bf16.mxu0 0
    %577 = vmatmul.mubr.bf16.gmra.mxu0 %v233
    %v578 = vpop.f32.mrf.mxu0
    %v579 = vadd.f32 %v145, %v578
    %v580 = vpop.f32.mrf.mxu0
    %v581 = vadd.f32 %v149, %v580
    %v582 = vpop.f32.mrf.mxu0
    %v583 = vadd.f32 %v145, %v582
    %v584 = vpop.f32.mrf.mxu0
    %v585 = vadd.f32 %v149, %v584
    %586 = vdwg.mxu0
    %587 = vmatprep.subr.bf16.mxu0 0
    %588 = vmatpush1.bf16.xpose.msra.mxu0 %v369
    %589 = vmatprep.subr.bf16.mxu0 0
    %590 = vmatpush1.bf16.xpose.msra.mxu0 %v368
    %591 = vmatprep.subr.bf16.mxu0 0
    %592 = vmatpush1.bf16.xpose.msra.mxu0 %v367
    %593 = vmatprep.subr.bf16.mxu0 0
    %594 = vmatpush1.bf16.xpose.msra.mxu0 %v366
    %595 = vmatprep.subr.bf16.mxu0 0
    %596 = vmatpush1.bf16.xpose.msra.mxu0 %v365
    %597 = vmatprep.subr.bf16.mxu0 0
    %598 = vmatpush1.bf16.xpose.msra.mxu0 %v364
    %599 = vmatprep.subr.bf16.mxu0 0
    %600 = vmatpush1.bf16.xpose.msra.mxu0 %v363
    %601 = vmatprep.subr.bf16.mxu0 0
    %602 = vmatpush1.bf16.xpose.msra.mxu0 %v362
    %603 = vmatprep.subr.bf16.mxu0 0
    %604 = vmatpush2.bf16.xpose.msra.mxu0 0
    %605 = vmatprep.subr.bf16.mxu0 0
    %606 = vmatpush2.bf16.xpose.msra.mxu0 0
    %607 = vmatprep.subr.bf16.mxu0 0
    %608 = vmatpush2.bf16.xpose.msra.mxu0 0
    %609 = vmatprep.subr.bf16.mxu0 0
    %610 = vmatpush2.bf16.xpose.msra.mxu0 0
    %611 = vmatprep.subr.bf16.mxu0 0
    %612 = vmatpush2.bf16.xpose.msra.mxu0 0
    %613 = vmatprep.subr.bf16.mxu0 0
    %614 = vmatpush2.bf16.xpose.msra.mxu0 0
    %615 = vmatprep.subr.bf16.mxu0 0
    %616 = vmatpush2.bf16.xpose.msra.mxu0 0
    %617 = vmatprep.subr.bf16.mxu0 0
    %618 = vmatpush2.bf16.xpose.msra.mxu0 0
    %619 = vmatprep.mubr.bf16.mxu0 0
    %620 = vmatmul.mubr.bf16.gmra.mxu0 %v218
    %v621 = vpop.f32.mrf.mxu0
    %v622 = vadd.f32 %v153, %v621
    %v623 = vpop.f32.mrf.mxu0
    %v624 = vpop.f32.mrf.mxu0
    %v625 = vadd.f32 %v153, %v624
    %v626 = vpop.f32.mrf.mxu0
    %627 = vmatprep.mubr.bf16.mxu0 0
    %628 = vmatmul.mubr.bf16.gmra.mxu0 %v219
    %v629 = vpop.f32.mrf.mxu0
    %v630 = vadd.f32 %v153, %v629
    %v631 = vpop.f32.mrf.mxu0
    %v632 = vpop.f32.mrf.mxu0
    %v633 = vadd.f32 %v153, %v632
    %v634 = vpop.f32.mrf.mxu0
    %635 = vmatprep.mubr.bf16.mxu0 0
    %636 = vmatmul.mubr.bf16.gmra.mxu0 %v220
    %v637 = vpop.f32.mrf.mxu0
    %v638 = vadd.f32 %v153, %v637
    %v639 = vpop.f32.mrf.mxu0
    %v640 = vpop.f32.mrf.mxu0
    %v641 = vadd.f32 %v153, %v640
    %v642 = vpop.f32.mrf.mxu0
    %643 = vmatprep.mubr.bf16.mxu0 0
    %644 = vmatmul.mubr.bf16.gmra.mxu0 %v221
    %v645 = vpop.f32.mrf.mxu0
    %v646 = vadd.f32 %v153, %v645
    %v647 = vpop.f32.mrf.mxu0
    %v648 = vpop.f32.mrf.mxu0
    %v649 = vadd.f32 %v153, %v648
    %v650 = vpop.f32.mrf.mxu0
    %651 = vmatprep.mubr.bf16.mxu0 0
    %652 = vmatmul.mubr.bf16.gmra.mxu0 %v222
    %v653 = vpop.f32.mrf.mxu0
    %v654 = vadd.f32 %v153, %v653
    %v655 = vpop.f32.mrf.mxu0
    %v656 = vpop.f32.mrf.mxu0
    %v657 = vadd.f32 %v153, %v656
    %v658 = vpop.f32.mrf.mxu0
    %659 = vmatprep.mubr.bf16.mxu0 0
    %660 = vmatmul.mubr.bf16.gmra.mxu0 %v223
    %v661 = vpop.f32.mrf.mxu0
    %v662 = vadd.f32 %v153, %v661
    %v663 = vpop.f32.mrf.mxu0
    %v664 = vpop.f32.mrf.mxu0
    %v665 = vadd.f32 %v153, %v664
    %v666 = vpop.f32.mrf.mxu0
    %667 = vmatprep.mubr.bf16.mxu0 0
    %668 = vmatmul.mubr.bf16.gmra.mxu0 %v224
    %v669 = vpop.f32.mrf.mxu0
    %v670 = vadd.f32 %v153, %v669
    %v671 = vpop.f32.mrf.mxu0
    %v672 = vpop.f32.mrf.mxu0
    %v673 = vadd.f32 %v153, %v672
    %v674 = vpop.f32.mrf.mxu0
    %675 = vmatprep.mubr.bf16.mxu0 0
    %676 = vmatmul.mubr.bf16.gmra.mxu0 %v225
    %v677 = vpop.f32.mrf.mxu0
    %v678 = vadd.f32 %v153, %v677
    %v679 = vpop.f32.mrf.mxu0
    %v680 = vpop.f32.mrf.mxu0
    %v681 = vadd.f32 %v153, %v680
    %v682 = vpop.f32.mrf.mxu0
    %683 = vmatprep.mubr.bf16.mxu0 0
    %684 = vmatmul.mubr.bf16.gmra.mxu0 %v226
    %v685 = vpop.f32.mrf.mxu0
    %v686 = vadd.f32 %v153, %v685
    %v687 = vpop.f32.mrf.mxu0
    %v688 = vpop.f32.mrf.mxu0
    %v689 = vadd.f32 %v153, %v688
    %v690 = vpop.f32.mrf.mxu0
    %691 = vmatprep.mubr.bf16.mxu0 0
    %692 = vmatmul.mubr.bf16.gmra.mxu0 %v227
    %v693 = vpop.f32.mrf.mxu0
    %v694 = vadd.f32 %v153, %v693
    %v695 = vpop.f32.mrf.mxu0
    %v696 = vpop.f32.mrf.mxu0
    %v697 = vadd.f32 %v153, %v696
    %v698 = vpop.f32.mrf.mxu0
    %699 = vmatprep.mubr.bf16.mxu0 0
    %700 = vmatmul.mubr.bf16.gmra.mxu0 %v228
    %v701 = vpop.f32.mrf.mxu0
    %v702 = vadd.f32 %v153, %v701
    %v703 = vpop.f32.mrf.mxu0
    %v704 = vpop.f32.mrf.mxu0
    %v705 = vadd.f32 %v153, %v704
    %v706 = vpop.f32.mrf.mxu0
    %707 = vmatprep.mubr.bf16.mxu0 0
    %708 = vmatmul.mubr.bf16.gmra.mxu0 %v229
    %v709 = vpop.f32.mrf.mxu0
    %v710 = vadd.f32 %v153, %v709
    %v711 = vpop.f32.mrf.mxu0
    %v712 = vpop.f32.mrf.mxu0
    %v713 = vadd.f32 %v153, %v712
    %v714 = vpop.f32.mrf.mxu0
    %715 = vmatprep.mubr.bf16.mxu0 0
    %716 = vmatmul.mubr.bf16.gmra.mxu0 %v230
    %v717 = vpop.f32.mrf.mxu0
    %v718 = vadd.f32 %v153, %v717
    %v719 = vpop.f32.mrf.mxu0
    %v720 = vpop.f32.mrf.mxu0
    %v721 = vadd.f32 %v153, %v720
    %v722 = vpop.f32.mrf.mxu0
    %723 = vmatprep.mubr.bf16.mxu0 0
    %724 = vmatmul.mubr.bf16.gmra.mxu0 %v231
    %v725 = vpop.f32.mrf.mxu0
    %v726 = vadd.f32 %v153, %v725
    %v727 = vpop.f32.mrf.mxu0
    %v728 = vpop.f32.mrf.mxu0
    %v729 = vadd.f32 %v153, %v728
    %v730 = vpop.f32.mrf.mxu0
    %731 = vmatprep.mubr.bf16.mxu0 0
    %732 = vmatmul.mubr.bf16.gmra.mxu0 %v232
    %v733 = vpop.f32.mrf.mxu0
    %v734 = vadd.f32 %v153, %v733
    %v735 = vpop.f32.mrf.mxu0
    %v736 = vpop.f32.mrf.mxu0
    %v737 = vadd.f32 %v153, %v736
    %v738 = vpop.f32.mrf.mxu0
    %739 = vmatprep.mubr.bf16.mxu0 0
    %740 = vmatmul.mubr.bf16.gmra.mxu0 %v233
    %v741 = vpop.f32.mrf.mxu0
    %v742 = vadd.f32 %v153, %v741
    %v743 = vpop.f32.mrf.mxu0
    %v744 = vpop.f32.mrf.mxu0
    %v745 = vadd.f32 %v153, %v744
    %v746 = vpop.f32.mrf.mxu0
    %747 = vdwg.mxu0
    %v748 = vpack.c.bf16 %v433, %v429
    %v749 = vpack.c.bf16 %v435, %v431
    %v750 = vpack.c.bf16 %v625, %v622
    %v751 = vpack.c.bf16 %v443, %v439
    %v752 = vpack.c.bf16 %v445, %v441
    %v753 = vpack.c.bf16 %v633, %v630
    %v754 = vpack.c.bf16 %v453, %v449
    %v755 = vpack.c.bf16 %v455, %v451
    %v756 = vpack.c.bf16 %v641, %v638
    %v757 = vpack.c.bf16 %v463, %v459
    %v758 = vpack.c.bf16 %v465, %v461
    %v759 = vpack.c.bf16 %v649, %v646
    %v760 = vpack.c.bf16 %v473, %v469
    %v761 = vpack.c.bf16 %v475, %v471
    %v762 = vpack.c.bf16 %v657, %v654
    %v763 = vpack.c.bf16 %v483, %v479
    %v764 = vpack.c.bf16 %v485, %v481
    %v765 = vpack.c.bf16 %v665, %v662
    %v766 = vpack.c.bf16 %v493, %v489
    %v767 = vpack.c.bf16 %v495, %v491
    %v768 = vpack.c.bf16 %v673, %v670
    %v769 = vpack.c.bf16 %v503, %v499
    %v770 = vpack.c.bf16 %v505, %v501
    %v771 = vpack.c.bf16 %v681, %v678
    %v772 = vpack.c.bf16 %v513, %v509
    %v773 = vpack.c.bf16 %v515, %v511
    %v774 = vpack.c.bf16 %v689, %v686
    %v775 = vpack.c.bf16 %v523, %v519
    %v776 = vpack.c.bf16 %v525, %v521
    %v777 = vpack.c.bf16 %v697, %v694
    %v778 = vpack.c.bf16 %v533, %v529
    %v779 = vpack.c.bf16 %v535, %v531
    %v780 = vpack.c.bf16 %v705, %v702
    %v781 = vpack.c.bf16 %v543, %v539
    %v782 = vpack.c.bf16 %v545, %v541
    %v783 = vpack.c.bf16 %v713, %v710
    %v784 = vpack.c.bf16 %v553, %v549
    %v785 = vpack.c.bf16 %v555, %v551
    %v786 = vpack.c.bf16 %v721, %v718
    %v787 = vpack.c.bf16 %v563, %v559
    %v788 = vpack.c.bf16 %v565, %v561
    %v789 = vpack.c.bf16 %v729, %v726
    %v790 = vpack.c.bf16 %v573, %v569
    %v791 = vpack.c.bf16 %v575, %v571
    %v792 = vpack.c.bf16 %v737, %v734
    %v793 = vpack.c.bf16 %v583, %v579
    %v794 = vpack.c.bf16 %v585, %v581
    %v795 = vpack.c.bf16 %v745, %v742
    %v844 = vunpack.c.l.b16 %v748
    %v845 = vunpack.c.l.b16 %v749
    %v846 = vunpack.c.l.b16 %v750
    %v847 = vunpack.c.h.b16 %v748
    %v848 = vunpack.c.h.b16 %v749
    %v849 = vunpack.c.h.b16 %v750
    %v850 = vunpack.c.l.b16 %v751
    %v851 = vunpack.c.l.b16 %v752
    %v852 = vunpack.c.l.b16 %v753
    %v853 = vunpack.c.h.b16 %v751
    %v854 = vunpack.c.h.b16 %v752
    %v855 = vunpack.c.h.b16 %v753
    %v856 = vunpack.c.l.b16 %v754
    %v857 = vunpack.c.l.b16 %v755
    %v858 = vunpack.c.l.b16 %v756
    %v859 = vunpack.c.h.b16 %v754
    %v860 = vunpack.c.h.b16 %v755
    %v861 = vunpack.c.h.b16 %v756
    %v862 = vunpack.c.l.b16 %v757
    %v863 = vunpack.c.l.b16 %v758
    %v864 = vunpack.c.l.b16 %v759
    %v865 = vunpack.c.h.b16 %v757
    %v866 = vunpack.c.h.b16 %v758
    %v867 = vunpack.c.h.b16 %v759
    %v868 = vunpack.c.l.b16 %v760
    %v869 = vunpack.c.l.b16 %v761
    %v870 = vunpack.c.l.b16 %v762
    %v871 = vunpack.c.h.b16 %v760
    %v872 = vunpack.c.h.b16 %v761
    %v873 = vunpack.c.h.b16 %v762
    %v874 = vunpack.c.l.b16 %v763
    %v875 = vunpack.c.l.b16 %v764
    %v876 = vunpack.c.l.b16 %v765
    %v877 = vunpack.c.h.b16 %v763
    %v878 = vunpack.c.h.b16 %v764
    %v879 = vunpack.c.h.b16 %v765
    %v880 = vunpack.c.l.b16 %v766
    %v881 = vunpack.c.l.b16 %v767
    %v882 = vunpack.c.l.b16 %v768
    %v883 = vunpack.c.h.b16 %v766
    %v884 = vunpack.c.h.b16 %v767
    %v885 = vunpack.c.h.b16 %v768
    %v886 = vunpack.c.l.b16 %v769
    %v887 = vunpack.c.l.b16 %v770
    %v888 = vunpack.c.l.b16 %v771
    %v889 = vunpack.c.h.b16 %v769
    %v890 = vunpack.c.h.b16 %v770
    %v891 = vunpack.c.h.b16 %v771
    %v892 = vunpack.c.l.b16 %v772
    %v893 = vunpack.c.l.b16 %v773
    %v894 = vunpack.c.l.b16 %v774
    %v895 = vunpack.c.h.b16 %v772
    %v896 = vunpack.c.h.b16 %v773
    %v897 = vunpack.c.h.b16 %v774
    %v898 = vunpack.c.l.b16 %v775
    %v899 = vunpack.c.l.b16 %v776
    %v900 = vunpack.c.l.b16 %v777
    %v901 = vunpack.c.h.b16 %v775
    %v902 = vunpack.c.h.b16 %v776
    %v903 = vunpack.c.h.b16 %v777
    %v904 = vunpack.c.l.b16 %v778
    %v905 = vunpack.c.l.b16 %v779
    %v906 = vunpack.c.l.b16 %v780
    %v907 = vunpack.c.h.b16 %v778
    %v908 = vunpack.c.h.b16 %v779
    %v909 = vunpack.c.h.b16 %v780
    %v910 = vunpack.c.l.b16 %v781
    %v911 = vunpack.c.l.b16 %v782
    %v912 = vunpack.c.l.b16 %v783
    %v913 = vunpack.c.h.b16 %v781
    %v914 = vunpack.c.h.b16 %v782
    %v915 = vunpack.c.h.b16 %v783
    %v916 = vunpack.c.l.b16 %v784
    %v917 = vunpack.c.l.b16 %v785
    %v918 = vunpack.c.l.b16 %v786
    %v919 = vunpack.c.h.b16 %v784
    %v920 = vunpack.c.h.b16 %v785
    %v921 = vunpack.c.h.b16 %v786
    %v922 = vunpack.c.l.b16 %v787
    %v923 = vunpack.c.l.b16 %v788
    %v924 = vunpack.c.l.b16 %v789
    %v925 = vunpack.c.h.b16 %v787
    %v926 = vunpack.c.h.b16 %v788
    %v927 = vunpack.c.h.b16 %v789
    %v928 = vunpack.c.l.b16 %v790
    %v929 = vunpack.c.l.b16 %v791
    %v930 = vunpack.c.l.b16 %v792
    %v931 = vunpack.c.h.b16 %v790
    %v932 = vunpack.c.h.b16 %v791
    %v933 = vunpack.c.h.b16 %v792
    %v934 = vunpack.c.l.b16 %v793
    %v935 = vunpack.c.l.b16 %v794
    %v936 = vunpack.c.l.b16 %v795
    %v937 = vunpack.c.h.b16 %v793
    %v938 = vunpack.c.h.b16 %v794
    %v939 = vunpack.c.h.b16 %v795
    %v940 = vpack.c.b16 %v845, %v844
    %v941 = vpack.c.b16 %v846, %v846
    %v942 = vpack.c.b16 %v848, %v847
    %v943 = vpack.c.b16 %v849, %v849
    %v944 = vpack.c.b16 %v851, %v850
    %v945 = vpack.c.b16 %v852, %v852
    %v946 = vpack.c.b16 %v854, %v853
    %v947 = vpack.c.b16 %v855, %v855
    %v948 = vpack.c.b16 %v857, %v856
    %v949 = vpack.c.b16 %v858, %v858
    %v950 = vpack.c.b16 %v860, %v859
    %v951 = vpack.c.b16 %v861, %v861
    %v952 = vpack.c.b16 %v863, %v862
    %v953 = vpack.c.b16 %v864, %v864
    %v954 = vpack.c.b16 %v866, %v865
    %v955 = vpack.c.b16 %v867, %v867
    %v956 = vpack.c.b16 %v869, %v868
    %v957 = vpack.c.b16 %v870, %v870
    %v958 = vpack.c.b16 %v872, %v871
    %v959 = vpack.c.b16 %v873, %v873
    %v960 = vpack.c.b16 %v875, %v874
    %v961 = vpack.c.b16 %v876, %v876
    %v962 = vpack.c.b16 %v878, %v877
    %v963 = vpack.c.b16 %v879, %v879
    %v964 = vpack.c.b16 %v881, %v880
    %v965 = vpack.c.b16 %v882, %v882
    %v966 = vpack.c.b16 %v884, %v883
    %v967 = vpack.c.b16 %v885, %v885
    %v968 = vpack.c.b16 %v887, %v886
    %v969 = vpack.c.b16 %v888, %v888
    %v970 = vpack.c.b16 %v890, %v889
    %v971 = vpack.c.b16 %v891, %v891
    %v972 = vpack.c.b16 %v893, %v892
    %v973 = vpack.c.b16 %v894, %v894
    %v974 = vpack.c.b16 %v896, %v895
    %v975 = vpack.c.b16 %v897, %v897
    %v976 = vpack.c.b16 %v899, %v898
    %v977 = vpack.c.b16 %v900, %v900
    %v978 = vpack.c.b16 %v902, %v901
    %v979 = vpack.c.b16 %v903, %v903
    %v980 = vpack.c.b16 %v905, %v904
    %v981 = vpack.c.b16 %v906, %v906
    %v982 = vpack.c.b16 %v908, %v907
    %v983 = vpack.c.b16 %v909, %v909
    %v984 = vpack.c.b16 %v911, %v910
    %v985 = vpack.c.b16 %v912, %v912
    %v986 = vpack.c.b16 %v914, %v913
    %v987 = vpack.c.b16 %v915, %v915
    %v988 = vpack.c.b16 %v917, %v916
    %v989 = vpack.c.b16 %v918, %v918
    %v990 = vpack.c.b16 %v920, %v919
    %v991 = vpack.c.b16 %v921, %v921
    %v992 = vpack.c.b16 %v923, %v922
    %v993 = vpack.c.b16 %v924, %v924
    %v994 = vpack.c.b16 %v926, %v925
    %v995 = vpack.c.b16 %v927, %v927
    %v996 = vpack.c.b16 %v929, %v928
    %v997 = vpack.c.b16 %v930, %v930
    %v998 = vpack.c.b16 %v932, %v931
    %v999 = vpack.c.b16 %v933, %v933
    %v1000 = vpack.c.b16 %v935, %v934
    %v1001 = vpack.c.b16 %v936, %v936
    %v1002 = vpack.c.b16 %v938, %v937
    %v1003 = vpack.c.b16 %v939, %v939
    %1068 = vst [vmem:[#allocation7] sm:$0xff] %v940
    %1069 = vst [vmem:[#allocation7 + $0x8] sm:$0xf] %v941
    %1070 = vst [vmem:[#allocation7 + $0xc] sm:$0xff] %v942
    %1071 = vst [vmem:[#allocation7 + $0x14] sm:$0xf] %v943
    %1072 = vst [vmem:[#allocation7 + $0x18] sm:$0xff] %v944
    %1073 = vst [vmem:[#allocation7 + $0x20] sm:$0xf] %v945
    %1074 = vst [vmem:[#allocation7 + $0x24] sm:$0xff] %v946
    %1075 = vst [vmem:[#allocation7 + $0x2c] sm:$0xf] %v947
    %1076 = vst [vmem:[#allocation7 + $0x30] sm:$0xff] %v948
    %1077 = vst [vmem:[#allocation7 + $0x38] sm:$0xf] %v949
    %1078 = vst [vmem:[#allocation7 + $0x3c] sm:$0xff] %v950
    %1079 = vst [vmem:[#allocation7 + $0x44] sm:$0xf] %v951
    %1080 = vst [vmem:[#allocation7 + $0x48] sm:$0xff] %v952
    %1081 = vst [vmem:[#allocation7 + $0x50] sm:$0xf] %v953
    %1082 = vst [vmem:[#allocation7 + $0x54] sm:$0xff] %v954
    %1083 = vst [vmem:[#allocation7 + $0x5c] sm:$0xf] %v955
    %1084 = vst [vmem:[#allocation7 + $0x60] sm:$0xff] %v956
    %1085 = vst [vmem:[#allocation7 + $0x68] sm:$0xf] %v957
    %1086 = vst [vmem:[#allocation7 + $0x6c] sm:$0xff] %v958
    %1087 = vst [vmem:[#allocation7 + $0x74] sm:$0xf] %v959
    %1088 = vst [vmem:[#allocation7 + $0x78] sm:$0xff] %v960
    %1089 = vst [vmem:[#allocation7 + $0x80] sm:$0xf] %v961
    %1090 = vst [vmem:[#allocation7 + $0x84] sm:$0xff] %v962
    %1091 = vst [vmem:[#allocation7 + $0x8c] sm:$0xf] %v963
    %1092 = vst [vmem:[#allocation7 + $0x90] sm:$0xff] %v964
    %1093 = vst [vmem:[#allocation7 + $0x98] sm:$0xf] %v965
    %1094 = vst [vmem:[#allocation7 + $0x9c] sm:$0xff] %v966
    %1095 = vst [vmem:[#allocation7 + $0xa4] sm:$0xf] %v967
    %1096 = vst [vmem:[#allocation7 + $0xa8] sm:$0xff] %v968
    %1097 = vst [vmem:[#allocation7 + $0xb0] sm:$0xf] %v969
    %1098 = vst [vmem:[#allocation7 + $0xb4] sm:$0xff] %v970
    %1099 = vst [vmem:[#allocation7 + $0xbc] sm:$0xf] %v971
    %1100 = vst [vmem:[#allocation7 + $0xc0] sm:$0xff] %v972
    %1101 = vst [vmem:[#allocation7 + $0xc8] sm:$0xf] %v973
    %1102 = vst [vmem:[#allocation7 + $0xcc] sm:$0xff] %v974
    %1103 = vst [vmem:[#allocation7 + $0xd4] sm:$0xf] %v975
    %1104 = vst [vmem:[#allocation7 + $0xd8] sm:$0xff] %v976
    %1105 = vst [vmem:[#allocation7 + $0xe0] sm:$0xf] %v977
    %1106 = vst [vmem:[#allocation7 + $0xe4] sm:$0xff] %v978
    %1107 = vst [vmem:[#allocation7 + $0xec] sm:$0xf] %v979
    %1108 = vst [vmem:[#allocation7 + $0xf0] sm:$0xff] %v980
    %1109 = vst [vmem:[#allocation7 + $0xf8] sm:$0xf] %v981
    %1110 = vst [vmem:[#allocation7 + $0xfc] sm:$0xff] %v982
    %1111 = vst [vmem:[#allocation7 + $0x104] sm:$0xf] %v983
    %1112 = vst [vmem:[#allocation7 + $0x108] sm:$0xff] %v984
    %1113 = vst [vmem:[#allocation7 + $0x110] sm:$0xf] %v985
    %1114 = vst [vmem:[#allocation7 + $0x114] sm:$0xff] %v986
    %1115 = vst [vmem:[#allocation7 + $0x11c] sm:$0xf] %v987
    %1116 = vst [vmem:[#allocation7 + $0x120] sm:$0xff] %v988
    %1117 = vst [vmem:[#allocation7 + $0x128] sm:$0xf] %v989
    %1118 = vst [vmem:[#allocation7 + $0x12c] sm:$0xff] %v990
    %1119 = vst [vmem:[#allocation7 + $0x134] sm:$0xf] %v991
    %1120 = vst [vmem:[#allocation7 + $0x138] sm:$0xff] %v992
    %1121 = vst [vmem:[#allocation7 + $0x140] sm:$0xf] %v993
    %1122 = vst [vmem:[#allocation7 + $0x144] sm:$0xff] %v994
    %1123 = vst [vmem:[#allocation7 + $0x14c] sm:$0xf] %v995
    %1124 = vst [vmem:[#allocation7 + $0x150] sm:$0xff] %v996
    %1125 = vst [vmem:[#allocation7 + $0x158] sm:$0xf] %v997
    %1126 = vst [vmem:[#allocation7 + $0x15c] sm:$0xff] %v998
    %1127 = vst [vmem:[#allocation7 + $0x164] sm:$0xf] %v999
    %1128 = vst [vmem:[#allocation7 + $0x168] sm:$0xff] %v1000
    %1129 = vst [vmem:[#allocation7 + $0x170] sm:$0xf] %v1001
    %1130 = vst [vmem:[#allocation7 + $0x174] sm:$0xff] %v1002
    %1131 = vst [vmem:[#allocation7 + $0x17c] sm:$0xf] %v1003
    // Predicated region
    $region22: #{tpu_custom_call.1} parent=1 // pred_check
      _
    $region23: #{tpu_custom_call.1} parent=1 // pred_check_branch
      %1133 = sbr.rel (0) target = $region25
    $region24: #{tpu_custom_call.1} parent=1 // pred_region
      %s1135 = ssub.s32 6144, 6144
      %1136 = vsyncadd [#allocation4], %s1135
      %s1137 = sshll.u32 [#allocation7], 4
      %s1138 = int_to_ptr.vmem [resolvable:$true] %s1137
      %1143 = dma.vmem_to_hbm [thread:$0]  %s1138, 6144, %s3, [#allocation4], 192, 192, 12
    $region25: #{tpu_custom_call.1} parent=1 // pred_fallthru
      _
    // Predicated region
    $region26: #{tpu_custom_call.1} parent=1 // pred_check
      _
    $region27: #{tpu_custom_call.1} parent=1 // pred_check_branch
      %1145 = sbr.rel (0) target = $region29
    $region28: #{tpu_custom_call.1} parent=1 // pred_region
      %1146 = dma.done [#allocation4], 6144
    $region29: #{tpu_custom_call.1} parent=1 // pred_fallthru
      _
    %1147 = vsyncpa [#allocation3], 1
    %1148 = vsyncpa [#allocation6], 1
    %1149 = vsyncpa [#allocation4], 1

</llo_original>
